<compile_context>
chip_gen: v5e
topology: v5e:2x2
jax: 0.10.0
libtpu: 0.0.40
codegen_flags: <defaults>
</compile_context>

<pallas_src>
import functools

import jax
import jax.numpy as jnp
from jax.experimental import pallas as pl
from jax.experimental.pallas import tpu as pltpu


def _rince_tile_kernel(x_ref, y_ref, pos_ref, row_ref, col_ref, *,
                       temperature, bf16_exp):
    """Processes one row tile of the BxB similarity matrix.

    x_ref:   (tb, D)    tile of X rows
    y_ref:   (B, D)     full Y (resident in VMEM, single pipeline buffer)
    pos_ref: (tb, 1)    exp(<x_r, y_r>/T) for this tile's rows
    row_ref: (tb, 1)    full row sums of exp(sim) for this tile's rows
    col_ref: (1, 1, B)  partial column sums of exp(sim) for this row tile
    """
    i = pl.program_id(0)
    inv_t = 1.0 / temperature

    x_t = x_ref[...]                 # (tb, D), native dtype -> MXU
    y_all = y_ref[...]               # (B, D)
    tb = x_t.shape[0]

    # sim tile = X_tile @ Y^T without materializing Y^T (NT matmul, f32 acc).
    sim = jax.lax.dot_general(
        x_t, y_all,
        dimension_numbers=(((1,), (1,)), ((), ())),
        preferred_element_type=jnp.float32,
    ) * inv_t                                                    # (tb, B) f32

    if bf16_exp:
        # v6e/v7x EUP runs bf16 transcendentals ~2x faster; reductions stay f32.
        xsim = jnp.exp(sim.astype(jnp.bfloat16)).astype(jnp.float32)
    else:
        xsim = jnp.exp(sim)                                      # (tb, B) f32

    # Full row sums for this tile's rows.
    row_ref[...] = jnp.sum(xsim, axis=1, keepdims=True)          # (tb, 1)

    # Per-tile partial column sums -> distinct output block per grid step
    # (keeps the grid axis "parallel"; reduced across tiles in the epilogue).
    col_ref[...] = jnp.sum(xsim, axis=0, keepdims=True)[None]    # (1, 1, B)

    # Positive similarities straight from the (tb, D) operands — no BxB mask.
    row_start = pl.multiple_of(i * tb, tb)
    y_t = y_ref[pl.ds(row_start, tb), :]                         # (tb, D)
    dots = jnp.sum(x_t.astype(jnp.float32) * y_t.astype(jnp.float32),
                   axis=1, keepdims=True)                        # (tb, 1)
    pos_ref[...] = jnp.exp(dots * inv_t)


def rince_loss(x, y, temperature=1.0, lam=0.01, q=0.1, block_rows=None,
               cast_matmul_bf16=False, bf16_exp=False):
    """Pallas TPU implementation of RINCE_loss.forward(X, Y)."""
    assert x.shape == y.shape and x.ndim == 2

    if cast_matmul_bf16 and x.dtype == jnp.float32:
        # MXU is bf16-native on v5e/v6e/v7x; f32 accumulation is preserved.
        x = x.astype(jnp.bfloat16)
        y = y.astype(jnp.bfloat16)

    b, d = x.shape
    itemsize = jnp.dtype(x.dtype).itemsize
    min_rows = {4: 8, 2: 16, 1: 32}.get(itemsize, 8)   # dtype-aware sublane tile

    # Physical VMEM (best effort; conservative fallback = v7x's 64 MiB).
    try:
        vmem_cap = int(pltpu.get_tpu_info().vmem_capacity_bytes)
    except Exception:
        vmem_cap = 64 * 1024 * 1024

    if block_rows is None:
        # 256 fills the MXU N-dim nicely; drop to 128 on small-VMEM chips (v7x)
        # with large batches so the (tb, B) f32 intermediates stay modest.
        block_rows = 128 if (vmem_cap <= 64 * 1024 * 1024 and b >= 4096) else 256
        block_rows = min(b, block_rows)
    assert b % block_rows == 0, "batch must be divisible by block_rows"
    assert block_rows == b or block_rows % min_rows == 0, (
        f"row tile must be a multiple of {min_rows} for dtype {x.dtype}")
    nb = b // block_rows

    # Footprint-derived scoped-VMEM budget.
    x_bytes = 2 * block_rows * d * itemsize          # double-buffered X tile
    y_bytes = b * d * itemsize                       # single-buffered resident Y
    interm_bytes = 2 * block_rows * b * 4            # sim + xsim (f32)
    out_bytes = 2 * (2 * block_rows * 4 + b * 4)     # small double-buffered outputs
    footprint = x_bytes + y_bytes + interm_bytes + out_bytes
    vmem_limit = max(32 * 1024 * 1024, int(footprint * 1.5) + (2 << 20))
    vmem_limit = min(vmem_limit, int(0.85 * vmem_cap))
    vmem_limit = max(vmem_limit, 16 * 1024 * 1024)

    kernel = functools.partial(_rince_tile_kernel,
                               temperature=float(temperature),
                               bf16_exp=bool(bf16_exp))

    pos, row_sum, col_partials = pl.pallas_call(
        kernel,
        out_shape=(
            jax.ShapeDtypeStruct((b, 1), jnp.float32),        # pos (diag of exp sim)
            jax.ShapeDtypeStruct((b, 1), jnp.float32),        # full row sums
            jax.ShapeDtypeStruct((nb, 1, b), jnp.float32),    # per-tile col partials
        ),
        grid_spec=pltpu.PrefetchScalarGridSpec(
            num_scalar_prefetch=0,
            grid=(nb,),
            in_specs=[
                pl.BlockSpec((block_rows, d), lambda i: (i, 0)),        # X row tile
                pl.BlockSpec((b, d), lambda i: (0, 0),
                             pipeline_mode=pl.Buffered(1)),             # full Y, 1 buffer
            ],
            out_specs=[
                pl.BlockSpec((block_rows, 1), lambda i: (i, 0)),
                pl.BlockSpec((block_rows, 1), lambda i: (i, 0)),
                pl.BlockSpec((1, 1, b), lambda i: (i, 0, 0)),           # per-tile block
            ],
        ),
        compiler_params=pltpu.CompilerParams(
            # Every output block is written by exactly one grid step, so the
            # axis is safely parallel (uses both TensorCores on v7x).
            dimension_semantics=("parallel",),
            vmem_limit_bytes=int(vmem_limit),
        ),
    )(x, y)

    # O(B) epilogue in plain JAX (negligible next to the O(B^2 * D) kernel work).
    pos = pos[:, 0]
    col_sum = jnp.sum(col_partials, axis=(0, 1))                  # (b,)
    # pos + neg == (full_row_sum + full_col_sum) / 2  (diagonal terms cancel).
    pos_plus_neg = (row_sum[:, 0] + col_sum) * 0.5
    neg_term = (lam * pos_plus_neg) ** q / q
    pos_term = -(pos ** q) / q
    return jnp.mean(pos_term) + jnp.mean(neg_term)


def _rince_ref(x, y, temperature=1.0, lam=0.01, q=0.1):
    """Pure-JAX reference mirroring the PyTorch module."""
    xsim = jnp.exp(x @ y.T / temperature)
    b = x.shape[0]
    neg_mask = 1.0 - jnp.eye(b, dtype=xsim.dtype)
    neg = (jnp.sum(xsim * neg_mask, axis=1) + jnp.sum(xsim * neg_mask, axis=0)) / 2
    pos = jnp.diag(xsim)
    neg_t = (lam * (pos + neg)) ** q / q
    pos_t = -(pos ** q) / q
    return jnp.mean(pos_t) + jnp.mean(neg_t)


if __name__ == "__main__":
    key = jax.random.PRNGKey(0)
    kx, ky = jax.random.split(key)
    B, D = 32, 64                      # small demo: batch=32, embedding dim=64
    x = jax.random.normal(kx, (B, D), dtype=jnp.float32)
    y = jax.random.normal(ky, (B, D), dtype=jnp.float32)
    # L2-normalize (typical for embedding similarity; keeps exp() well-behaved).
    x = x / jnp.linalg.norm(x, axis=1, keepdims=True)
    y = y / jnp.linalg.norm(y, axis=1, keepdims=True)

    temperature, lam, q = 0.5, 0.01, 0.1
    ref = _rince_ref(x, y, temperature=temperature, lam=lam, q=q)

    # 1) Exact-parity path: f32 operands, block_rows=8 -> 4 parallel row tiles.
    loss = rince_loss(x, y, temperature=temperature, lam=lam, q=q, block_rows=8)
    jax.block_until_ready(loss)
    assert jnp.allclose(loss, ref, rtol=1e-5, atol=1e-5), (loss, ref)

    # 2) Fast path: bf16 operands to the MXU (16-row tiles for bf16 sublane packing).
    loss_bf16 = rince_loss(x, y, temperature=temperature, lam=lam, q=q,
                           block_rows=16, cast_matmul_bf16=True)
    jax.block_until_ready(loss_bf16)
    assert jnp.allclose(loss_bf16, ref, rtol=2e-2, atol=2e-2), (loss_bf16, ref)

    print("KERNEL_OK")
</pallas_src>

<mosaic_0001>
module attributes {stable_mosaic.version = 11 : i64} {
  func.func @_rince_tile_kernel(%arg0: i32, %arg1: memref<8x64xf32, #tpu.memory_space<vmem>>, %arg2: memref<32x64xf32, #tpu.memory_space<vmem>>, %arg3: memref<8x1xf32, #tpu.memory_space<vmem>>, %arg4: memref<8x1xf32, #tpu.memory_space<vmem>>, %arg5: memref<1x1x32xf32, #tpu.memory_space<vmem>>) attributes {dimension_semantics = [#tpu.dimension_semantics<parallel>], iteration_bounds = array<i64: 4>, scalar_prefetch = 0 : i64, scratch_operands = 0 : i64, tpu.core_type = #tpu.core_type<tc>, window_params = [{transform_indices = @transform_0, window_bounds = array<i64: 8, 64>}, {pipeline_mode = #tpu.pipeline_mode<synchronous>, transform_indices = @transform_1, window_bounds = array<i64: 32, 64>}, {transform_indices = @transform_2, window_bounds = array<i64: 8, 1>}, {transform_indices = @transform_3, window_bounds = array<i64: 8, 1>}, {transform_indices = @transform_4, window_bounds = array<i64: 1, 1, 32>}]} {
    %c0 = arith.constant 0 : index
    %c0_0 = arith.constant 0 : index
    %0 = vector.load %arg1[%c0, %c0_0] : memref<8x64xf32, #tpu.memory_space<vmem>>, vector<8x64xf32>
    %c0_1 = arith.constant 0 : index
    %c0_2 = arith.constant 0 : index
    %1 = vector.load %arg2[%c0_1, %c0_2] : memref<32x64xf32, #tpu.memory_space<vmem>>, vector<32x64xf32>
    %cst = arith.constant dense<0.000000e+00> : vector<8x32xf32>
    %2 = tpu.matmul %0, %1, %cst {dimension_numbers = #tpu.dot_dimension_numbers<[1], [1], [0], [0], [0, 0, 1, 0], [], []>} : vector<8x64xf32>, vector<32x64xf32>, vector<8x32xf32> -> vector<8x32xf32>
    %cst_3 = arith.constant 2.000000e+00 : f32
    %3 = vector.broadcast %cst_3 : f32 to vector<8x32xf32>
    %4 = arith.mulf %2, %3 : vector<8x32xf32>
    %5 = math.exp %4 : vector<8x32xf32>
    %cst_4 = arith.constant dense<0.000000e+00> : vector<8xf32>
    %6 = vector.multi_reduction <add>, %5, %cst_4 [1] : vector<8x32xf32> to vector<8xf32>
    %7 = vector.shape_cast %6 : vector<8xf32> to vector<8x1xf32>
    %c0_5 = arith.constant 0 : index
    %c0_6 = arith.constant 0 : index
    %8 = vector.load %arg4[%c0_5, %c0_6] : memref<8x1xf32, #tpu.memory_space<vmem>>, vector<8x1xf32>
    tpu.vector_store %arg4[%c0_5, %c0_6], %7 {strides = array<i32>} : memref<8x1xf32, #tpu.memory_space<vmem>>, vector<8x1xf32>,
    %cst_7 = arith.constant dense<0.000000e+00> : vector<32xf32>
    %9 = vector.multi_reduction <add>, %5, %cst_7 [0] : vector<8x32xf32> to vector<32xf32>
    %10 = vector.shape_cast %9 : vector<32xf32> to vector<1x32xf32>
    %11 = vector.shape_cast %10 : vector<1x32xf32> to vector<1x1x32xf32>
    %c0_8 = arith.constant 0 : index
    %c0_9 = arith.constant 0 : index
    %c0_10 = arith.constant 0 : index
    %12 = vector.load %arg5[%c0_8, %c0_9, %c0_10] : memref<1x1x32xf32, #tpu.memory_space<vmem>>, vector<1x1x32xf32>
    tpu.vector_store %arg5[%c0_8, %c0_9, %c0_10], %11 {strides = array<i32>} : memref<1x1x32xf32, #tpu.memory_space<vmem>>, vector<1x1x32xf32>,
    %c8_i32 = arith.constant 8 : i32
    %13 = arith.muli %arg0, %c8_i32 : i32
    %14 = tpu.assume_multiple %13, 8 : i32
    %15 = arith.index_cast %14 : i32 to index
    %c0_11 = arith.constant 0 : index
    %16 = vector.load %arg2[%15, %c0_11] : memref<32x64xf32, #tpu.memory_space<vmem>>, vector<8x64xf32>
    %17 = arith.mulf %0, %16 : vector<8x64xf32>
    %cst_12 = arith.constant dense<0.000000e+00> : vector<8xf32>
    %18 = vector.multi_reduction <add>, %17, %cst_12 [1] : vector<8x64xf32> to vector<8xf32>
    %19 = vector.shape_cast %18 : vector<8xf32> to vector<8x1xf32>
    %cst_13 = arith.constant 2.000000e+00 : f32
    %20 = vector.broadcast %cst_13 : f32 to vector<8x1xf32>
    %21 = arith.mulf %19, %20 : vector<8x1xf32>
    %22 = math.exp %21 : vector<8x1xf32>
    %c0_14 = arith.constant 0 : index
    %c0_15 = arith.constant 0 : index
    %23 = vector.load %arg3[%c0_14, %c0_15] : memref<8x1xf32, #tpu.memory_space<vmem>>, vector<8x1xf32>
    tpu.vector_store %arg3[%c0_14, %c0_15], %22 {strides = array<i32>} : memref<8x1xf32, #tpu.memory_space<vmem>>, vector<8x1xf32>,
    return
  }
  func.func @transform_0(%arg0: i32) -> (i32, i32) {
    %c0_i32 = arith.constant 0 : i32
    %c0_i32_0 = arith.constant 0 : i32
    return %arg0, %c0_i32 : i32, i32
  }
  func.func @transform_1(%arg0: i32) -> (i32, i32) {
    %c0_i32 = arith.constant 0 : i32
    %c0_i32_0 = arith.constant 0 : i32
    %c0_i32_1 = arith.constant 0 : i32
    return %c0_i32, %c0_i32_0 : i32, i32
  }
  func.func @transform_2(%arg0: i32) -> (i32, i32) {
    %c0_i32 = arith.constant 0 : i32
    %c0_i32_0 = arith.constant 0 : i32
    return %arg0, %c0_i32 : i32, i32
  }
  func.func @transform_3(%arg0: i32) -> (i32, i32) {
    %c0_i32 = arith.constant 0 : i32
    %c0_i32_0 = arith.constant 0 : i32
    return %arg0, %c0_i32 : i32, i32
  }
  func.func @transform_4(%arg0: i32) -> (i32, i32, i32) {
    %c0_i32 = arith.constant 0 : i32
    %c0_i32_0 = arith.constant 0 : i32
    %c0_i32_1 = arith.constant 0 : i32
    return %arg0, %c0_i32, %c0_i32_0 : i32, i32, i32
  }
}

</mosaic_0001>

<llo_original>
// kernel: tpu_custom_call.1
$region0: #{tpu_custom_call.1}
  #allocation0 [shape = 'u32[]', space=smem, size = 0x4, offset = 0x4, fixed_abs, tag = 'smem constant byte address 0x4 - core index']
  #allocation1 [shape = 'u32[72,128]{1,0:T(1,128)}', space=vmem, size = 0x9000, scoped, tag = 'internal scratch']
  %s0 = inlined_call_operand.hbm [shape: f32[32,64], index: 0, kind: input, shape index: {}]
  %s1 = inlined_call_operand.hbm [shape: f32[32,64], index: 1, kind: input, shape index: {}]
  %s2 = inlined_call_operand.vmem [shape: f32[32,1], index: 2, kind: output, shape index: {0}]
  %s3 = inlined_call_operand.vmem [shape: f32[32,1], index: 3, kind: output, shape index: {1}]
  %s4 = inlined_call_operand.hbm [shape: f32[4,1,32], index: 4, kind: output, shape index: {2}]
  %5 = xla_tuple %s2, %s3, %s4
  %s6 = sld [smem:[#allocation0]]
  $region65: #{tpu_custom_call.1} parent=0
    _
  %s8 = ssub.s32 1, %s6
  %s9 = scalar_select 0, %s8, %s6
  $region1: #{tpu_custom_call.1} parent=0
    #allocation2 [shape = 'u8[8192]{0}', space=vmem, size = 0x2000, scoped, tag = 'input window, operand 0']
    #allocation3 [shape = 's32[2]{0}', space=sflag, size = 0x8, scoped, tag = 'scoped memory for tpu_custom_call.1']
    #allocation4 [shape = 's32[2]{0}', space=sflag, size = 0x8, scoped, tag = 'scoped memory for tpu_custom_call.1']
    #allocation5 [shape = 'u8[16384]{0}', space=vmem, size = 0x4000, scoped, tag = 'input window, operand 1, single buffered']
    #allocation6 [shape = 's32[1]{0}', space=sflag, size = 0x4, scoped, tag = 'scoped memory for tpu_custom_call.1']
    #allocation7 [shape = 'u8[1024]{0}', space=vmem, size = 0x400, scoped, tag = 'output window, operand 2']
    %10 = vsyncpa [#allocation3], 0
    %s11 = scalar_lea.sflag [#allocation3], 1
    %12 = vsyncpa %s11, 0
    %13 = vsyncpa [#allocation6], 0
    %14 = vsyncpa [#allocation4], 0
    %s15 = scalar_lea.sflag [#allocation4], 1
    %16 = vsyncpa %s15, 0
    loop: start=0, step=1, limit=6
    $region2: #{tpu_custom_call.1} parent=1 // loop_pre_header
      _
    $region3: #{tpu_custom_call.1} parent=1 // loop_header
      %s18 = sphi 0, %s22
      %p19 = scmp.ge.s32.totalorder %s18, 6
      %s28 = sphi 0, %s30
      %s31 = sphi 0, %s28
      %s32 = sphi 0, %s31
      %s48 = sphi 0, %s32
      %s52 = sphi 0, %s52
      %s54 = sphi 0, %s52
      %s55 = sphi 0, %s54
      %s69 = sphi 0, %s55
      %s75 = sphi 0, %s77
      %s78 = sphi 0, %s75
      %s79 = sphi 0, %s78
      %s95 = sphi 0, %s79
      %s101 = sphi 0, %s103
      %s104 = sphi 0, %s101
      %s105 = sphi 0, %s104
      %s121 = sphi 0, %s105
      %s127 = sphi 0, %s129
      %s130 = sphi 0, %s127
      %s131 = sphi 0, %s130
      %s147 = sphi 0, %s131
    $region4: #{tpu_custom_call.1} parent=1 // loop_header_branch
      %21 = sbr.rel (%p19) target = $region8
    $region5: #{tpu_custom_call.1} parent=1 // loop_body
      %s23 = ssub.s32 %s18, 1
      %s24 = ssub.s32 %s18, 2
      %s25 = sadd.s32 %s18, 1
      %s26 = ssub.s32 %s18, %s25
      %p27 = scmp.eq.s32.totalorder %s26, 0
      %s29 = sadd.s32 %s28, 1
      %s30 = scalar_select %p27, %s28, %s29
      %p33 = pneg %p27
      %p34 = scmp.eq.s32.totalorder %s18, 3
      %p35 = por %p33, %p34
      %p36 = scmp.ne.s32.totalorder %s28, %s31
      %p37 = scmp.eq.s32.totalorder %s18, 0
      %p38 = por %p36, %p37
      %p39 = scmp.ne.s32.totalorder %s28, %s31
      %p40 = scmp.eq.s32.totalorder %s23, 3
      %p41 = por %p39, %p40
      %p42 = scmp.ne.s32.totalorder %s31, %s32
      %p43 = scmp.eq.s32.totalorder %s23, 0
      %p44 = por %p42, %p43
      %p45 = scmp.ne.s32.totalorder %s31, %s32
      %p46 = scmp.eq.s32.totalorder %s24, 3
      %p47 = por %p45, %p46
      %p49 = scmp.ne.s32.totalorder %s32, %s48
      %p50 = scmp.eq.s32.totalorder %s24, 0
      %p51 = por %p49, %p50
      %s53 = sadd.s32 %s52, 1
      %p56 = scmp.eq.s32.totalorder %s18, 3
      %p57 = scmp.ne.s32.totalorder %s52, %s54
      %p58 = scmp.eq.s32.totalorder %s18, 0
      %p59 = por %p57, %p58
      %p60 = scmp.ne.s32.totalorder %s52, %s54
      %p61 = scmp.eq.s32.totalorder %s23, 3
      %p62 = por %p60, %p61
      %p63 = scmp.ne.s32.totalorder %s54, %s55
      %p64 = scmp.eq.s32.totalorder %s23, 0
      %p65 = por %p63, %p64
      %p66 = scmp.ne.s32.totalorder %s54, %s55
      %p67 = scmp.eq.s32.totalorder %s24, 3
      %p68 = por %p66, %p67
      %p70 = scmp.ne.s32.totalorder %s55, %s69
      %p71 = scmp.eq.s32.totalorder %s24, 0
      %p72 = por %p70, %p71
      %s73 = ssub.s32 %s18, %s25
      %p74 = scmp.eq.s32.totalorder %s73, 0
      %s76 = sadd.s32 %s75, 1
      %s77 = scalar_select %p74, %s75, %s76
      %p80 = pneg %p74
      %p81 = scmp.eq.s32.totalorder %s18, 3
      %p82 = por %p80, %p81
      %p83 = scmp.ne.s32.totalorder %s75, %s78
      %p84 = scmp.eq.s32.totalorder %s18, 0
      %p85 = por %p83, %p84
      %p86 = scmp.ne.s32.totalorder %s75, %s78
      %p87 = scmp.eq.s32.totalorder %s23, 3
      %p88 = por %p86, %p87
      %p89 = scmp.ne.s32.totalorder %s78, %s79
      %p90 = scmp.eq.s32.totalorder %s23, 0
      %p91 = por %p89, %p90
      %p92 = scmp.ne.s32.totalorder %s78, %s79
      %p93 = scmp.eq.s32.totalorder %s24, 3
      %p94 = por %p92, %p93
      %p96 = scmp.ne.s32.totalorder %s79, %s95
      %p97 = scmp.eq.s32.totalorder %s24, 0
      %p98 = por %p96, %p97
      %s99 = ssub.s32 %s18, %s25
      %p100 = scmp.eq.s32.totalorder %s99, 0
      %s102 = sadd.s32 %s101, 1
      %s103 = scalar_select %p100, %s101, %s102
      %p106 = pneg %p100
      %p107 = scmp.eq.s32.totalorder %s18, 3
      %p108 = por %p106, %p107
      %p109 = scmp.ne.s32.totalorder %s101, %s104
      %p110 = scmp.eq.s32.totalorder %s18, 0
      %p111 = por %p109, %p110
      %p112 = scmp.ne.s32.totalorder %s101, %s104
      %p113 = scmp.eq.s32.totalorder %s23, 3
      %p114 = por %p112, %p113
      %p115 = scmp.ne.s32.totalorder %s104, %s105
      %p116 = scmp.eq.s32.totalorder %s23, 0
      %p117 = por %p115, %p116
      %p118 = scmp.ne.s32.totalorder %s104, %s105
      %p119 = scmp.eq.s32.totalorder %s24, 3
      %p120 = por %p118, %p119
      %p122 = scmp.ne.s32.totalorder %s105, %s121
      %p123 = scmp.eq.s32.totalorder %s24, 0
      %p124 = por %p122, %p123
      %s125 = ssub.s32 %s18, %s25
      %p126 = scmp.eq.s32.totalorder %s125, 0
      %s128 = sadd.s32 %s127, 1
      %s129 = scalar_select %p126, %s127, %s128
      %p132 = pneg %p126
      %p133 = scmp.eq.s32.totalorder %s18, 3
      %p134 = por %p132, %p133
      %p135 = scmp.ne.s32.totalorder %s127, %s130
      %p136 = scmp.eq.s32.totalorder %s18, 0
      %p137 = por %p135, %p136
      %p138 = scmp.ne.s32.totalorder %s127, %s130
      %p139 = scmp.eq.s32.totalorder %s23, 3
      %p140 = por %p138, %p139
      %p141 = scmp.ne.s32.totalorder %s130, %s131
      %p142 = scmp.eq.s32.totalorder %s23, 0
      %p143 = por %p141, %p142
      %p144 = scmp.ne.s32.totalorder %s130, %s131
      %p145 = scmp.eq.s32.totalorder %s24, 3
      %p146 = por %p144, %p145
      %p148 = scmp.ne.s32.totalorder %s131, %s147
      %p149 = scmp.eq.s32.totalorder %s24, 0
      %p150 = por %p148, %p149
      %p151 = scmp.le.s32.totalorder 1, %s18
      %p152 = scmp.lt.s32.totalorder %s18, 5
      %p153 = pnand %p151, %p152
      %p154 = pneg %p153
      // Predicated region
      $region9: #{tpu_custom_call.1} parent=5 // pred_check
        _
      $region10: #{tpu_custom_call.1} parent=5 // pred_check_branch
        %156 = sbr.rel (%p153) target = $region12
      $region11: #{tpu_custom_call.1} parent=5 // pred_region
        %s157 = ssub.s32 %s18, 1
        // Predicated region
        $region13: #{tpu_custom_call.1} parent=11 // pred_check
          %p158 = pneg %p65
        $region14: #{tpu_custom_call.1} parent=11 // pred_check_branch
          %160 = sbr.rel (%p158) target = $region16
        $region15: #{tpu_custom_call.1} parent=11 // pred_region
          %162 = vsyncadd [#allocation6], 0
          %s163 = sshll.u32 %s1, 4
          %s164 = int_to_ptr.hbm [resolvable:$true] %s163
          %s165 = sshll.u32 [#allocation5], 4
          %s166 = int_to_ptr.vmem [resolvable:$true] %s165
          %171 = dma.hbm_to_vmem [thread:$0]  %s164, 512, %s166, [#allocation6], 128, 128, 8
        $region16: #{tpu_custom_call.1} parent=11 // pred_fallthru
          _
      $region12: #{tpu_custom_call.1} parent=5 // pred_fallthru
        _
      %p172 = scmp.lt.s32.totalorder %s18, 4
      // Predicated region
      $region17: #{tpu_custom_call.1} parent=5 // pred_check
        %p173 = pneg %p172
      $region18: #{tpu_custom_call.1} parent=5 // pred_check_branch
        %175 = sbr.rel (%p173) target = $region20
      $region19: #{tpu_custom_call.1} parent=5 // pred_region
        // Predicated region
        $region21: #{tpu_custom_call.1} parent=19 // pred_check
          %p176 = pneg %p38
        $region22: #{tpu_custom_call.1} parent=19 // pred_check_branch
          %178 = sbr.rel (%p176) target = $region24
        $region23: #{tpu_custom_call.1} parent=19 // pred_region
          %s179 = sand.u32 %s28, 1
          %s180 = scalar_lea.sflag [#allocation3], %s179
          %s181 = sand.u32 %s28, 1
          %s182 = smul.addr %s181, 8
          %s183 = scalar_lea.vmem [#allocation2], %s182
          %185 = vsyncadd %s180, 0
          %s186 = smul.addr %s18, 8
          %s187 = scalar_lea.hbm %s0, %s186
          %s189 = sshll.u32 %s187, 4
          %s190 = int_to_ptr.hbm [resolvable:$true] %s189
          %s191 = sshll.u32 %s183, 4
          %s192 = int_to_ptr.vmem [resolvable:$true] %s191
          %194 = dma.hbm_to_vmem [thread:$0]  %s190, 128, %s192, %s180
        $region24: #{tpu_custom_call.1} parent=19 // pred_fallthru
          _
      $region20: #{tpu_custom_call.1} parent=5 // pred_fallthru
        _
      %p195 = scmp.le.s32.totalorder 1, %s18
      %p196 = scmp.lt.s32.totalorder %s18, 5
      %p197 = pnand %p195, %p196
      %p198 = pneg %p197
      // Predicated region
      $region25: #{tpu_custom_call.1} parent=5 // pred_check
        _
      $region26: #{tpu_custom_call.1} parent=5 // pred_check_branch
        %200 = sbr.rel (%p197) target = $region28
      $region27: #{tpu_custom_call.1} parent=5 // pred_region
        %s201 = ssub.s32 %s18, 1
        %s202 = sand.u32 %s31, 1
        %s203 = scalar_lea.sflag [#allocation3], %s202
        %s204 = sand.u32 %s31, 1
        %s205 = smul.addr %s204, 8
        %s206 = scalar_lea.vmem [#allocation2], %s205
        // Predicated region
        $region29: #{tpu_custom_call.1} parent=27 // pred_check
          %p207 = pneg %p44
        $region30: #{tpu_custom_call.1} parent=27 // pred_check_branch
          %209 = sbr.rel (%p207) target = $region32
        $region31: #{tpu_custom_call.1} parent=27 // pred_region
          %211 = dma.done %s203, 128
        $region32: #{tpu_custom_call.1} parent=27 // pred_fallthru
          _
        // Predicated region
        $region33: #{tpu_custom_call.1} parent=27 // pred_check
          %p212 = pneg %p65
        $region34: #{tpu_custom_call.1} parent=27 // pred_check_branch
          %214 = sbr.rel (%p212) target = $region36
        $region35: #{tpu_custom_call.1} parent=27 // pred_region
          %216 = dma.done [#allocation6], 512
        $region36: #{tpu_custom_call.1} parent=27 // pred_fallthru
          _
        %s217 = sand.u32 %s31, 1
        %s218 = scalar_lea.sflag [#allocation3], %s217
        %s219 = sand.u32 %s31, 1
        %s220 = smul.addr %s219, 8
        %s221 = scalar_lea.vmem [#allocation2], %s220
        %p222 = pneg %p44
        %p223 = pneg %p41
        %p224 = pneg %p65
        %p225 = pneg %p62
        %p226 = pneg %p91
        %p227 = pneg %p88
        %p228 = scmp.lt.s32.totalorder %s23, 3
        %s229 = scalar_select %p228, %s23, 3
        %s230 = smul.addr %s229, 8
        %s231 = scalar_lea.vmem %s2, %s230
        %p232 = pneg %p117
        %p233 = pneg %p114
        %p234 = scmp.lt.s32.totalorder %s23, 3
        %s235 = scalar_select %p234, %s23, 3
        %s236 = smul.addr %s235, 8
        %s237 = scalar_lea.vmem %s3, %s236
        %p238 = pneg %p143
        %p239 = pneg %p140
        %s240 = sand.u32 %s130, 1
        %s241 = scalar_lea.sflag [#allocation4], %s240
        %s242 = sand.u32 %s130, 1
        %s243 = scalar_lea.vmem [#allocation7], %s242
        %p244 = scmp.lt.s32.totalorder %s23, 3
        %s245 = scalar_select %p244, %s23, 3
        %s246 = smul.addr %s245, 8
        %s247 = scalar_lea.vmem %s2, %s246
        %p248 = scmp.lt.s32.totalorder %s23, 3
        %s249 = scalar_select %p248, %s23, 3
        %s250 = smul.addr %s249, 8
        %s251 = scalar_lea.vmem %s3, %s250
        %v252 = vld [vmem:[%s206] sm:$0xff]
        %v253 = vld [vmem:[#allocation5] sm:$0xff]
        %v254 = vld [vmem:[#allocation5 + $0x8] sm:$0xff]
        %v255 = vld [vmem:[#allocation5 + $0x10] sm:$0xff]
        %v256 = vld [vmem:[#allocation5 + $0x18] sm:$0xff]
        %vm257 = vcmask 523264
        %v259 = vsel %vm257, %v252, 0
        %v262 = vsel %vm257, %v253, 0
        %v265 = vsel %vm257, %v254, 0
        %v268 = vsel %vm257, %v255, 0
        %v271 = vsel %vm257, %v256, 0
        %273 = vmatpush.xpose.msra.mxu0 0.0
        %274 = vmatpush.xpose.msra.mxu0 0.0
        %275 = vmatpush.xpose.msra.mxu0 0.0
        %276 = vmatpush.xpose.msra.mxu0 0.0
        %277 = vmatpush.xpose.msra.mxu0 0.0
        %278 = vmatpush.xpose.msra.mxu0 0.0
        %279 = vmatpush.xpose.msra.mxu0 0.0
        %280 = vmatpush.xpose.msra.mxu0 0.0
        %281 = vmatpush.xpose.msra.mxu0 0.0
        %282 = vmatpush.xpose.msra.mxu0 0.0
        %283 = vmatpush.xpose.msra.mxu0 0.0
        %284 = vmatpush.xpose.msra.mxu0 0.0
        %285 = vmatpush.xpose.msra.mxu0 %v271
        %286 = vmatpush.xpose.msra.mxu0 %v268
        %287 = vmatpush.xpose.msra.mxu0 %v265
        %288 = vmatpush.xpose.msra.mxu0 %v262
        %289 = vmatmul.f32.gmra.mxu0 %v259
        %v290 = vpop.f32.mrf.mxu0
        %v291 = vadd.f32 0.0, %v290
        %292 = vdwg.mxu0
        %v293 = vmul.f32 %v291, 2.0
        %v294 = vmul.f32 %v293, 1.442695
        %v295 = vpow.pop %v294
        %vm296 = vcmask 261120
        %v297 = vsel %vm296, %v295, 0.0
        %298 = vadd.xlane.f32.xlu0 %v297
        %v299 = vpop.xlane.xlu0 %298
        %vm300 = vcmask 7168
        %301 = vst.msk [vmem:[%s251] sm:$0xff] %vm300, %v299
        %v302 = vrot.slane %v297, 4
        %v303 = vadd.f32 %v297, %v302
        %v304 = vrot.slane %v303, 2
        %v305 = vadd.f32 %v303, %v304
        %v306 = vrot.slane %v305, 1
        %v307 = vadd.f32 %v305, %v306
        %vm308 = vcmask 253952
        %309 = vst.msk [vmem:[%s243] sm:$0x1] %vm308, %v307
        %s310 = smul.u32 %s23, 8
        %s311 = scalar_lea.vmem [#allocation5], %s310
        %v312 = vld [vmem:[%s311] sm:$0xff]
        %v313 = vmul.f32 %v252, %v312
        %v314 = vsel %vm257, %v313, 0.0
        %315 = vadd.xlane.f32.xlu0 %v314
        %v316 = vpop.xlane.xlu0 %315
        %v317 = vmul.f32 %v316, 2.0
        %v318 = vmul.f32 %v317, 1.442695
        %v319 = vpow.pop %v318
        %320 = vst.msk [vmem:[%s247] sm:$0xff] %vm300, %v319
        %p321 = scmp.lt.s32.totalorder %s23, 3
        %s322 = scalar_select %p321, %s23, 3
        %s323 = smul.addr %s322, 8
        %s324 = scalar_lea.vmem %s2, %s323
        %p325 = scmp.lt.s32.totalorder %s23, 3
        %s326 = scalar_select %p325, %s23, 3
        %s327 = smul.addr %s326, 8
        %s328 = scalar_lea.vmem %s3, %s327
        %s329 = sand.u32 %s130, 1
        %s330 = scalar_lea.sflag [#allocation4], %s329
        %s331 = sand.u32 %s130, 1
        %s332 = scalar_lea.vmem [#allocation7], %s331
        // Predicated region
        $region37: #{tpu_custom_call.1} parent=27 // pred_check
          %p333 = pneg %p88
        $region38: #{tpu_custom_call.1} parent=27 // pred_check_branch
          %335 = sbr.rel (%p333) target = $region40
        $region39: #{tpu_custom_call.1} parent=27 // pred_region
          _
        $region40: #{tpu_custom_call.1} parent=27 // pred_fallthru
          _
        // Predicated region
        $region41: #{tpu_custom_call.1} parent=27 // pred_check
          %p336 = pneg %p114
        $region42: #{tpu_custom_call.1} parent=27 // pred_check_branch
          %338 = sbr.rel (%p336) target = $region44
        $region43: #{tpu_custom_call.1} parent=27 // pred_region
          _
        $region44: #{tpu_custom_call.1} parent=27 // pred_fallthru
          _
        // Predicated region
        $region45: #{tpu_custom_call.1} parent=27 // pred_check
          %p339 = pneg %p140
        $region46: #{tpu_custom_call.1} parent=27 // pred_check_branch
          %341 = sbr.rel (%p339) target = $region48
        $region47: #{tpu_custom_call.1} parent=27 // pred_region
          %343 = vsyncadd %s330, 0
          %s344 = scalar_lea.hbm %s4, %s23
          %s346 = sshll.u32 %s332, 4
          %s347 = int_to_ptr.vmem [resolvable:$true] %s346
          %s348 = sshll.u32 %s344, 4
          %s349 = int_to_ptr.hbm [resolvable:$true] %s348
          %351 = dma.vmem_to_hbm [thread:$0]  %s347, 16, %s349, %s330
        $region48: #{tpu_custom_call.1} parent=27 // pred_fallthru
          _
      $region28: #{tpu_custom_call.1} parent=5 // pred_fallthru
        _
      %p352 = scmp.le.s32.totalorder 2, %s18
      // Predicated region
      $region49: #{tpu_custom_call.1} parent=5 // pred_check
        %p353 = pneg %p352
      $region50: #{tpu_custom_call.1} parent=5 // pred_check_branch
        %355 = sbr.rel (%p353) target = $region52
      $region51: #{tpu_custom_call.1} parent=5 // pred_region
        %s356 = ssub.s32 %s18, 2
        // Predicated region
        $region53: #{tpu_custom_call.1} parent=51 // pred_check
          %p357 = pneg %p94
        $region54: #{tpu_custom_call.1} parent=51 // pred_check_branch
          %359 = sbr.rel (%p357) target = $region56
        $region55: #{tpu_custom_call.1} parent=51 // pred_region
          %p360 = scmp.lt.s32.totalorder %s24, 3
          %s361 = scalar_select %p360, %s24, 3
          %s362 = smul.addr %s361, 8
          %s363 = scalar_lea.vmem %s2, %s362
        $region56: #{tpu_custom_call.1} parent=51 // pred_fallthru
          _
        // Predicated region
        $region57: #{tpu_custom_call.1} parent=51 // pred_check
          %p364 = pneg %p120
        $region58: #{tpu_custom_call.1} parent=51 // pred_check_branch
          %366 = sbr.rel (%p364) target = $region60
        $region59: #{tpu_custom_call.1} parent=51 // pred_region
          %p367 = scmp.lt.s32.totalorder %s24, 3
          %s368 = scalar_select %p367, %s24, 3
          %s369 = smul.addr %s368, 8
          %s370 = scalar_lea.vmem %s3, %s369
        $region60: #{tpu_custom_call.1} parent=51 // pred_fallthru
          _
        // Predicated region
        $region61: #{tpu_custom_call.1} parent=51 // pred_check
          %p371 = pneg %p146
        $region62: #{tpu_custom_call.1} parent=51 // pred_check_branch
          %373 = sbr.rel (%p371) target = $region64
        $region63: #{tpu_custom_call.1} parent=51 // pred_region
          %s374 = sand.u32 %s131, 1
          %s375 = scalar_lea.sflag [#allocation4], %s374
          %s376 = sand.u32 %s131, 1
          %s377 = scalar_lea.vmem [#allocation7], %s376
          %379 = dma.done %s375, 16
        $region64: #{tpu_custom_call.1} parent=51 // pred_fallthru
          _
      $region52: #{tpu_custom_call.1} parent=5 // pred_fallthru
        _
    $region6: #{tpu_custom_call.1} parent=1 // loop_footer
      %s22 = sadd.s32 1, %s18
    $region7: #{tpu_custom_call.1} parent=1 // loop_footer_branch
      %17 = sbr.rel target = $region3
    $region8: #{tpu_custom_call.1} parent=1 // loop_exit
      _
    %380 = vsyncpa [#allocation3], 1
    %s381 = scalar_lea.sflag [#allocation3], 1
    %382 = vsyncpa %s381, 1
    %383 = vsyncpa [#allocation6], 1
    %384 = vsyncpa [#allocation4], 1
    %s385 = scalar_lea.sflag [#allocation4], 1
    %386 = vsyncpa %s385, 1

</llo_original>
